<compile_context>
chip_gen: v7x
topology: tpu7x:2x2x1
jax: 0.10.0
libtpu: 0.0.40
codegen_flags: <defaults>
</compile_context>

<pallas_src>
import math

import jax
import jax.numpy as jnp
from jax.experimental import pallas as pl
from jax.experimental.pallas import tpu as pltpu


def _round_up(x, m):
    return (x + m - 1) // m * m


def _vmem_capacity_bytes():
    """Per-core VMEM capacity; conservative fallback if the query fails."""
    try:
        return int(pltpu.get_tpu_info().vmem_capacity_bytes)
    except Exception:
        return 64 << 20  # v7x per-TC VMEM (safe lower bound for all gens)


def _kernel(x_ref, t_ref, seld_ref, sela_ref, out_ref):
    # Native-dtype stream from HBM; cast to f32 on the VPU (no-op for f32
    # inputs, free when memory-bound).
    x = x_ref[...].astype(jnp.float32)        # (tba, sd), lane-dense
    t = t_ref[...].astype(jnp.float32)

    abs_pos = jnp.abs(t + x)                  # full 128-lane VPU work
    abs_neg = jnp.abs(t - x)

    # Segmented reductions on the otherwise idle MXU, using the hoisted
    # constant 0/1 selectors (constant index_map -> VMEM-resident, no
    # per-step rebuild).
    sel_d = seld_ref[...]                     # (sd, S):   reduce over D
    sel_a = sela_ref[...]                     # (tb, tba): reduce over atoms

    pos_rows = jnp.dot(abs_pos, sel_d, preferred_element_type=jnp.float32)
    neg_rows = jnp.dot(abs_neg, sel_d, preferred_element_type=jnp.float32)

    pos = jnp.dot(sel_a, pos_rows, preferred_element_type=jnp.float32)  # (tb, S)
    neg = jnp.dot(sel_a, neg_rows, preferred_element_type=jnp.float32)

    # Per-grid-step partial sum; final sum / numel done in the wrapper.
    out_ref[0, 0] = jnp.sum(jnp.minimum(pos, neg))


def _choose_tb(b, atoms, sd, dtype, vmem_capacity):
    """Molecules per grid step.

    Constraints:
      * per-input working tile fits a generation-aware budget
        (~capacity/10, capped at 12 MiB),
      * at least 2 grid steps whenever b >= 2 (v7x: both TensorCores pull
        from HBM on the "parallel" axis),
      * tb * atoms is a multiple of the sublane tile so the (8, 128)
        BlockSpec divisibility rule holds for any atoms value.
    """
    budget = max(1 << 20, min(vmem_capacity // 10, 12 << 20))
    sd_pad = _round_up(sd, 128)                      # lanes pad to 128 in VMEM
    bytes_per_mol = max(1, atoms * sd_pad * 4)       # f32 working copies
    max_tb = max(1, budget // bytes_per_mol)
    max_tb = min(max_tb, b)                          # never larger than B
    if b >= 2:
        max_tb = min(max_tb, (b + 1) // 2)           # guarantee >= 2 grid steps

    itemsize = jnp.dtype(dtype).itemsize
    sublane = 8 * max(1, 4 // itemsize)              # 8 (f32) / 16 (bf16) / ...
    g = sublane // math.gcd(atoms, sublane)          # tb multiple of g => aligned rows
    return max(g, (max_tb // g) * g)


def phase_loss_atomistic_mae(inputs, targets, atoms):
    """Pallas TPU implementation of PhaseLossAtomisticMAE.forward."""
    assert inputs.shape == targets.shape
    n, num_states, dim = inputs.shape
    assert n % atoms == 0
    b = n // atoms
    sd = num_states * dim
    numel = n * sd

    vmem_capacity = _vmem_capacity_bytes()
    tb = _choose_tb(b, atoms, sd, inputs.dtype, vmem_capacity)
    grid = pl.cdiv(b, tb)
    tba = tb * atoms
    padded_n = grid * tba

    # Free, contiguous reshapes only: no transpose, no dtype change in HBM.
    x2 = inputs.reshape(n, sd)
    t2 = targets.reshape(n, sd)
    # Zero-pad the molecule axis if B does not divide evenly: zero rows give
    # |0+0| = |0-0| = 0, so padded molecules contribute exactly 0 to the loss.
    if padded_n != n:
        pad = ((0, padded_n - n), (0, 0))
        x2 = jnp.pad(x2, pad)
        t2 = jnp.pad(t2, pad)

    # Hoisted constant 0/1 selector matrices (built once, reused every step).
    #   sel_d[k, s] = 1  iff  s*D <= k < (s+1)*D        -> reduce over D
    #   sel_a[m, r] = 1  iff  m*atoms <= r < (m+1)*atoms -> reduce over atoms
    sel_d = (jnp.arange(sd, dtype=jnp.int32)[:, None] // dim
             == jnp.arange(num_states, dtype=jnp.int32)[None, :]
             ).astype(jnp.float32)                      # (sd, S)
    sel_a = (jnp.arange(tba, dtype=jnp.int32)[None, :] // atoms
             == jnp.arange(tb, dtype=jnp.int32)[:, None]
             ).astype(jnp.float32)                      # (tb, tba)

    partials = pl.pallas_call(
        _kernel,
        out_shape=jax.ShapeDtypeStruct((grid, 1), jnp.float32),
        grid_spec=pltpu.PrefetchScalarGridSpec(
            num_scalar_prefetch=0,
            grid=(grid,),
            in_specs=[
                pl.BlockSpec((tba, sd), lambda i: (i, 0)),
                pl.BlockSpec((tba, sd), lambda i: (i, 0)),
                # Constant blocks: stay resident, no re-DMA across steps.
                pl.BlockSpec((sd, num_states), lambda i: (0, 0)),
                pl.BlockSpec((tb, tba), lambda i: (0, 0)),
            ],
            out_specs=pl.BlockSpec((1, 1), lambda i: (i, 0),
                                   memory_space=pltpu.SMEM),
        ),
        compiler_params=pltpu.CompilerParams(
            dimension_semantics=("parallel",),
            vmem_limit_bytes=int(vmem_capacity * 0.8),
        ),
    )(x2, t2, sel_d, sel_a)

    return jnp.sum(partials) / jnp.float32(numel)


def phase_loss_reference(inputs, targets, atoms):
    """Pure-JAX reference mirroring the PyTorch forward exactly."""
    s, d = targets.shape[1], targets.shape[2]
    t = targets.reshape(-1, atoms, s, d)
    x = inputs.reshape(-1, atoms, s, d)
    positive = jnp.sum(jnp.abs(t + x), axis=(1, 3))
    negative = jnp.sum(jnp.abs(t - x), axis=(1, 3))
    return jnp.sum(jnp.minimum(positive, negative)) / targets.size


if __name__ == "__main__":
    # Small shapes consistent with the module: B molecules, `atoms` atoms each,
    # S electronic-state pairs, D vector components.
    B, atoms, S, D = 2, 4, 8, 16
    N = B * atoms  # 8

    key = jax.random.PRNGKey(0)
    k1, k2 = jax.random.split(key)
    inputs = jax.random.normal(k1, (N, S, D), dtype=jnp.float32)
    targets = jax.random.normal(k2, (N, S, D), dtype=jnp.float32)

    loss = jax.block_until_ready(phase_loss_atomistic_mae(inputs, targets, atoms))
    ref = jax.block_until_ready(phase_loss_reference(inputs, targets, atoms))

    assert jnp.allclose(loss, ref, rtol=1e-5, atol=1e-6), (loss, ref)
    print("KERNEL_OK")
</pallas_src>

<mosaic_0001>
module attributes {stable_mosaic.version = 11 : i64} {
  func.func @_kernel(%arg0: i32, %arg1: memref<8x128xf32, #tpu.memory_space<vmem>>, %arg2: memref<8x128xf32, #tpu.memory_space<vmem>>, %arg3: memref<128x8xf32, #tpu.memory_space<vmem>>, %arg4: memref<2x8xf32, #tpu.memory_space<vmem>>, %arg5: memref<1x1xf32, #tpu.memory_space<smem>>) attributes {dimension_semantics = [#tpu.dimension_semantics<parallel>], iteration_bounds = array<i64: 1>, scalar_prefetch = 0 : i64, scratch_operands = 0 : i64, tpu.core_type = #tpu.core_type<tc>, window_params = [{transform_indices = @transform_0, window_bounds = array<i64: 8, 128>}, {transform_indices = @transform_1, window_bounds = array<i64: 8, 128>}, {pipeline_mode = #tpu.pipeline_mode<synchronous>, transform_indices = @transform_2, window_bounds = array<i64: 128, 8>}, {pipeline_mode = #tpu.pipeline_mode<synchronous>, transform_indices = @transform_3, window_bounds = array<i64: 2, 8>}, {transform_indices = @transform_4, window_bounds = array<i64: 1, 1>}]} {
    %c0 = arith.constant 0 : index
    %c0_0 = arith.constant 0 : index
    %0 = vector.load %arg1[%c0, %c0_0] : memref<8x128xf32, #tpu.memory_space<vmem>>, vector<8x128xf32>
    %c0_1 = arith.constant 0 : index
    %c0_2 = arith.constant 0 : index
    %1 = vector.load %arg2[%c0_1, %c0_2] : memref<8x128xf32, #tpu.memory_space<vmem>>, vector<8x128xf32>
    %2 = arith.addf %1, %0 : vector<8x128xf32>
    %3 = math.absf %2 : vector<8x128xf32>
    %4 = arith.subf %1, %0 : vector<8x128xf32>
    %5 = math.absf %4 : vector<8x128xf32>
    %c0_3 = arith.constant 0 : index
    %c0_4 = arith.constant 0 : index
    %6 = vector.load %arg3[%c0_3, %c0_4] : memref<128x8xf32, #tpu.memory_space<vmem>>, vector<128x8xf32>
    %c0_5 = arith.constant 0 : index
    %c0_6 = arith.constant 0 : index
    %7 = vector.load %arg4[%c0_5, %c0_6] : memref<2x8xf32, #tpu.memory_space<vmem>>, vector<2x8xf32>
    %cst = arith.constant dense<0.000000e+00> : vector<8x8xf32>
    %8 = tpu.matmul %3, %6, %cst {dimension_numbers = #tpu.dot_dimension_numbers<[1], [0], [0], [1], [0, 0, 1, 1], [], []>} : vector<8x128xf32>, vector<128x8xf32>, vector<8x8xf32> -> vector<8x8xf32>
    %cst_7 = arith.constant dense<0.000000e+00> : vector<8x8xf32>
    %9 = tpu.matmul %5, %6, %cst_7 {dimension_numbers = #tpu.dot_dimension_numbers<[1], [0], [0], [1], [0, 0, 1, 1], [], []>} : vector<8x128xf32>, vector<128x8xf32>, vector<8x8xf32> -> vector<8x8xf32>
    %cst_8 = arith.constant dense<0.000000e+00> : vector<2x8xf32>
    %10 = tpu.matmul %7, %8, %cst_8 {dimension_numbers = #tpu.dot_dimension_numbers<[1], [0], [0], [1], [0, 0, 1, 1], [], []>} : vector<2x8xf32>, vector<8x8xf32>, vector<2x8xf32> -> vector<2x8xf32>
    %cst_9 = arith.constant dense<0.000000e+00> : vector<2x8xf32>
    %11 = tpu.matmul %7, %9, %cst_9 {dimension_numbers = #tpu.dot_dimension_numbers<[1], [0], [0], [1], [0, 0, 1, 1], [], []>} : vector<2x8xf32>, vector<8x8xf32>, vector<2x8xf32> -> vector<2x8xf32>
    %12 = arith.minimumf %10, %11 : vector<2x8xf32>
    %13 = vector.shape_cast %12 : vector<2x8xf32> to vector<1x2x8xf32>
    %cst_10 = arith.constant dense<0.000000e+00> : vector<1xf32>
    %14 = vector.multi_reduction <add>, %13, %cst_10 [1, 2] : vector<1x2x8xf32> to vector<1xf32>
    %15 = vector.shape_cast %14 : vector<1xf32> to vector<1x1x1xf32>
    %16 = vector.extract %15[0, 0, 0] : f32 from vector<1x1x1xf32>
    %c0_11 = arith.constant 0 : index
    %c0_12 = arith.constant 0 : index
    %17 = memref.load %arg5[%c0_11, %c0_12] : memref<1x1xf32, #tpu.memory_space<smem>>
    memref.store %16, %arg5[%c0_11, %c0_12] : memref<1x1xf32, #tpu.memory_space<smem>>
    return
  }
  func.func @transform_0(%arg0: i32) -> (i32, i32) {
    %c0_i32 = arith.constant 0 : i32
    %c0_i32_0 = arith.constant 0 : i32
    return %arg0, %c0_i32 : i32, i32
  }
  func.func @transform_1(%arg0: i32) -> (i32, i32) {
    %c0_i32 = arith.constant 0 : i32
    %c0_i32_0 = arith.constant 0 : i32
    return %arg0, %c0_i32 : i32, i32
  }
  func.func @transform_2(%arg0: i32) -> (i32, i32) {
    %c0_i32 = arith.constant 0 : i32
    %c0_i32_0 = arith.constant 0 : i32
    %c0_i32_1 = arith.constant 0 : i32
    return %c0_i32, %c0_i32_0 : i32, i32
  }
  func.func @transform_3(%arg0: i32) -> (i32, i32) {
    %c0_i32 = arith.constant 0 : i32
    %c0_i32_0 = arith.constant 0 : i32
    %c0_i32_1 = arith.constant 0 : i32
    return %c0_i32, %c0_i32_0 : i32, i32
  }
  func.func @transform_4(%arg0: i32) -> (i32, i32) {
    %c0_i32 = arith.constant 0 : i32
    %c0_i32_0 = arith.constant 0 : i32
    return %arg0, %c0_i32 : i32, i32
  }
}

</mosaic_0001>

<llo_original>
// kernel: tpu_custom_call.1
$region0: #{tpu_custom_call.1}
  #allocation0 [shape = 'u32[]', space=smem, size = 0x4, offset = 0x4, fixed_abs, tag = 'smem constant byte address 0x4 - core index']
  #allocation1 [shape = 'u32[144,128]{1,0:T(1,128)}', space=vmem, size = 0x12000, scoped, tag = 'internal scratch']
  %s0 = inlined_call_operand.vmem [shape: f32[8,128], index: 0, kind: input, shape index: {}]
  %s1 = inlined_call_operand.vmem [shape: f32[8,128], index: 1, kind: input, shape index: {}]
  %s2 = inlined_call_operand.vmem [shape: f32[128,8], index: 2, kind: input, shape index: {}]
  %s3 = inlined_call_operand.vmem [shape: f32[2,8], index: 3, kind: input, shape index: {}]
  %s4 = inlined_call_operand.hbm [shape: f32[1,1], index: 4, kind: output, shape index: {}]
  %s5 = sld [smem:[#allocation0]]
  $region26: #{tpu_custom_call.1} parent=0
    _
  %s7 = ssub.s32 1, %s5
  %s8 = scalar_select 0, %s7, %s5
  $region1: #{tpu_custom_call.1} parent=0
    #allocation2 [shape = 'u8[512]{0}', space=smem, size = 0x200, scoped, tag = 'output window, operand 0, single buffered']
    #allocation3 [shape = 's32[1]{0}', space=sflag, size = 0x4, scoped, tag = 'scoped memory for tpu_custom_call.1']
    %9 = vsyncpa [#allocation3], 0
    // Predicated region
    $region2: #{tpu_custom_call.1} parent=1 // pred_check
      _
    $region3: #{tpu_custom_call.1} parent=1 // pred_check_branch
      %11 = sbr.rel (0) target = $region5
    $region4: #{tpu_custom_call.1} parent=1 // pred_region
      _
    $region5: #{tpu_custom_call.1} parent=1 // pred_fallthru
      _
    // Predicated region
    $region6: #{tpu_custom_call.1} parent=1 // pred_check
      _
    $region7: #{tpu_custom_call.1} parent=1 // pred_check_branch
      %13 = sbr.rel (0) target = $region9
    $region8: #{tpu_custom_call.1} parent=1 // pred_region
      _
    $region9: #{tpu_custom_call.1} parent=1 // pred_fallthru
      _
    // Predicated region
    $region10: #{tpu_custom_call.1} parent=1 // pred_check
      _
    $region11: #{tpu_custom_call.1} parent=1 // pred_check_branch
      %15 = sbr.rel (0) target = $region13
    $region12: #{tpu_custom_call.1} parent=1 // pred_region
      _
    $region13: #{tpu_custom_call.1} parent=1 // pred_fallthru
      _
    // Predicated region
    $region14: #{tpu_custom_call.1} parent=1 // pred_check
      _
    $region15: #{tpu_custom_call.1} parent=1 // pred_check_branch
      %17 = sbr.rel (0) target = $region17
    $region16: #{tpu_custom_call.1} parent=1 // pred_region
      _
    $region17: #{tpu_custom_call.1} parent=1 // pred_fallthru
      _
    %v18 = vld [vmem:[%s0] sm:$0xff]
    %v19 = vld [vmem:[%s1] sm:$0xff]
    %v20 = vadd.f32 %v19, %v18
    %v21 = vand.u32 2147483647, %v20
    %v22 = vsub.f32 %v19, %v18
    %v23 = vand.u32 2147483647, %v22
    %v24 = vld [vmem:[%s2] sm:$0xff]
    %v25 = vld [vmem:[%s2 + $0x8] sm:$0xff]
    %v26 = vld [vmem:[%s2 + $0x10] sm:$0xff]
    %v27 = vld [vmem:[%s2 + $0x18] sm:$0xff]
    %v28 = vld [vmem:[%s2 + $0x20] sm:$0xff]
    %v29 = vld [vmem:[%s2 + $0x28] sm:$0xff]
    %v30 = vld [vmem:[%s2 + $0x30] sm:$0xff]
    %v31 = vld [vmem:[%s2 + $0x38] sm:$0xff]
    %v32 = vld [vmem:[%s2 + $0x40] sm:$0xff]
    %v33 = vld [vmem:[%s2 + $0x48] sm:$0xff]
    %v34 = vld [vmem:[%s2 + $0x50] sm:$0xff]
    %v35 = vld [vmem:[%s2 + $0x58] sm:$0xff]
    %v36 = vld [vmem:[%s2 + $0x60] sm:$0xff]
    %v37 = vld [vmem:[%s2 + $0x68] sm:$0xff]
    %v38 = vld [vmem:[%s2 + $0x70] sm:$0xff]
    %v39 = vld [vmem:[%s2 + $0x78] sm:$0xff]
    %v40 = vld [vmem:[%s3] sm:$0x3]
    %41 = vmatprep.subr.mxu0 0.0
    %42 = vmatpush1.msra.mxu0 %v24
    %43 = vmatprep.subr.mxu0 0.0
    %44 = vmatpush1.msra.mxu0 %v25
    %45 = vmatprep.subr.mxu0 0.0
    %46 = vmatpush1.msra.mxu0 %v26
    %47 = vmatprep.subr.mxu0 0.0
    %48 = vmatpush1.msra.mxu0 %v27
    %49 = vmatprep.subr.mxu0 0.0
    %50 = vmatpush1.msra.mxu0 %v28
    %51 = vmatprep.subr.mxu0 0.0
    %52 = vmatpush1.msra.mxu0 %v29
    %53 = vmatprep.subr.mxu0 0.0
    %54 = vmatpush1.msra.mxu0 %v30
    %55 = vmatprep.subr.mxu0 0.0
    %56 = vmatpush1.msra.mxu0 %v31
    %57 = vmatprep.subr.mxu0 0.0
    %58 = vmatpush1.msra.mxu0 %v32
    %59 = vmatprep.subr.mxu0 0.0
    %60 = vmatpush1.msra.mxu0 %v33
    %61 = vmatprep.subr.mxu0 0.0
    %62 = vmatpush1.msra.mxu0 %v34
    %63 = vmatprep.subr.mxu0 0.0
    %64 = vmatpush1.msra.mxu0 %v35
    %65 = vmatprep.subr.mxu0 0.0
    %66 = vmatpush1.msra.mxu0 %v36
    %67 = vmatprep.subr.mxu0 0.0
    %68 = vmatpush1.msra.mxu0 %v37
    %69 = vmatprep.subr.mxu0 0.0
    %70 = vmatpush1.msra.mxu0 %v38
    %71 = vmatprep.subr.mxu0 0.0
    %72 = vmatpush1.msra.mxu0 %v39
    %73 = vmatprep.subr.mxu0 0.0
    %74 = vmatpush1.msra.mxu0 0.0
    %75 = vmatprep.subr.mxu0 0.0
    %76 = vmatpush1.msra.mxu0 0.0
    %77 = vmatprep.subr.mxu0 0.0
    %78 = vmatpush1.msra.mxu0 0.0
    %79 = vmatprep.subr.mxu0 0.0
    %80 = vmatpush1.msra.mxu0 0.0
    %81 = vmatprep.subr.mxu0 0.0
    %82 = vmatpush1.msra.mxu0 0.0
    %83 = vmatprep.subr.mxu0 0.0
    %84 = vmatpush1.msra.mxu0 0.0
    %85 = vmatprep.subr.mxu0 0.0
    %86 = vmatpush1.msra.mxu0 0.0
    %87 = vmatprep.subr.mxu0 0.0
    %88 = vmatpush1.msra.mxu0 0.0
    %89 = vmatprep.subr.mxu0 0.0
    %90 = vmatpush1.msra.mxu0 0.0
    %91 = vmatprep.subr.mxu0 0.0
    %92 = vmatpush1.msra.mxu0 0.0
    %93 = vmatprep.subr.mxu0 0.0
    %94 = vmatpush1.msra.mxu0 0.0
    %95 = vmatprep.subr.mxu0 0.0
    %96 = vmatpush1.msra.mxu0 0.0
    %97 = vmatprep.subr.mxu0 0.0
    %98 = vmatpush1.msra.mxu0 0.0
    %99 = vmatprep.subr.mxu0 0.0
    %100 = vmatpush1.msra.mxu0 0.0
    %101 = vmatprep.subr.mxu0 0.0
    %102 = vmatpush1.msra.mxu0 0.0
    %103 = vmatprep.subr.mxu0 0.0
    %104 = vmatpush1.msra.mxu0 0.0
    %105 = vmatprep.mubr.f32.mxu0 0.0
    %106 = vmatmul.mubr.f32.gmra.mrb[0].mxu0 %v21
    %v107 = vpop.f32.mrb[0].mxu0
    %v108 = vadd.f32 0.0, %v107
    %v109 = vpop.f32.mrb[0].mxu0
    %110 = vdwg.mxu0
    %111 = vmatprep.subr.mxu0 0.0
    %112 = vmatpush1.msra.mxu0 %v24
    %113 = vmatprep.subr.mxu0 0.0
    %114 = vmatpush1.msra.mxu0 %v25
    %115 = vmatprep.subr.mxu0 0.0
    %116 = vmatpush1.msra.mxu0 %v26
    %117 = vmatprep.subr.mxu0 0.0
    %118 = vmatpush1.msra.mxu0 %v27
    %119 = vmatprep.subr.mxu0 0.0
    %120 = vmatpush1.msra.mxu0 %v28
    %121 = vmatprep.subr.mxu0 0.0
    %122 = vmatpush1.msra.mxu0 %v29
    %123 = vmatprep.subr.mxu0 0.0
    %124 = vmatpush1.msra.mxu0 %v30
    %125 = vmatprep.subr.mxu0 0.0
    %126 = vmatpush1.msra.mxu0 %v31
    %127 = vmatprep.subr.mxu0 0.0
    %128 = vmatpush1.msra.mxu0 %v32
    %129 = vmatprep.subr.mxu0 0.0
    %130 = vmatpush1.msra.mxu0 %v33
    %131 = vmatprep.subr.mxu0 0.0
    %132 = vmatpush1.msra.mxu0 %v34
    %133 = vmatprep.subr.mxu0 0.0
    %134 = vmatpush1.msra.mxu0 %v35
    %135 = vmatprep.subr.mxu0 0.0
    %136 = vmatpush1.msra.mxu0 %v36
    %137 = vmatprep.subr.mxu0 0.0
    %138 = vmatpush1.msra.mxu0 %v37
    %139 = vmatprep.subr.mxu0 0.0
    %140 = vmatpush1.msra.mxu0 %v38
    %141 = vmatprep.subr.mxu0 0.0
    %142 = vmatpush1.msra.mxu0 %v39
    %143 = vmatprep.subr.mxu0 0.0
    %144 = vmatpush1.msra.mxu0 0.0
    %145 = vmatprep.subr.mxu0 0.0
    %146 = vmatpush1.msra.mxu0 0.0
    %147 = vmatprep.subr.mxu0 0.0
    %148 = vmatpush1.msra.mxu0 0.0
    %149 = vmatprep.subr.mxu0 0.0
    %150 = vmatpush1.msra.mxu0 0.0
    %151 = vmatprep.subr.mxu0 0.0
    %152 = vmatpush1.msra.mxu0 0.0
    %153 = vmatprep.subr.mxu0 0.0
    %154 = vmatpush1.msra.mxu0 0.0
    %155 = vmatprep.subr.mxu0 0.0
    %156 = vmatpush1.msra.mxu0 0.0
    %157 = vmatprep.subr.mxu0 0.0
    %158 = vmatpush1.msra.mxu0 0.0
    %159 = vmatprep.subr.mxu0 0.0
    %160 = vmatpush1.msra.mxu0 0.0
    %161 = vmatprep.subr.mxu0 0.0
    %162 = vmatpush1.msra.mxu0 0.0
    %163 = vmatprep.subr.mxu0 0.0
    %164 = vmatpush1.msra.mxu0 0.0
    %165 = vmatprep.subr.mxu0 0.0
    %166 = vmatpush1.msra.mxu0 0.0
    %167 = vmatprep.subr.mxu0 0.0
    %168 = vmatpush1.msra.mxu0 0.0
    %169 = vmatprep.subr.mxu0 0.0
    %170 = vmatpush1.msra.mxu0 0.0
    %171 = vmatprep.subr.mxu0 0.0
    %172 = vmatpush1.msra.mxu0 0.0
    %173 = vmatprep.subr.mxu0 0.0
    %174 = vmatpush1.msra.mxu0 0.0
    %175 = vmatprep.mubr.f32.mxu0 0.0
    %176 = vmatmul.mubr.f32.gmra.mrb[0].mxu0 %v23
    %v177 = vpop.f32.mrb[0].mxu0
    %v178 = vadd.f32 0.0, %v177
    %v179 = vpop.f32.mrb[0].mxu0
    %180 = vdwg.mxu0
    %vm181 = vcmask 64512
    %v183 = vsel %vm181, %v40, 0
    %185 = vmatprep.subr.mxu0 0.0
    %186 = vmatpush1.msra.mxu0 %v108
    %187 = vmatprep.subr.mxu0 0.0
    %188 = vmatpush1.msra.mxu0 0.0
    %189 = vmatprep.subr.mxu0 0.0
    %190 = vmatpush1.msra.mxu0 0.0
    %191 = vmatprep.subr.mxu0 0.0
    %192 = vmatpush1.msra.mxu0 0.0
    %193 = vmatprep.subr.mxu0 0.0
    %194 = vmatpush1.msra.mxu0 0.0
    %195 = vmatprep.subr.mxu0 0.0
    %196 = vmatpush1.msra.mxu0 0.0
    %197 = vmatprep.subr.mxu0 0.0
    %198 = vmatpush1.msra.mxu0 0.0
    %199 = vmatprep.subr.mxu0 0.0
    %200 = vmatpush1.msra.mxu0 0.0
    %201 = vmatprep.subr.mxu0 0.0
    %202 = vmatpush1.msra.mxu0 0.0
    %203 = vmatprep.subr.mxu0 0.0
    %204 = vmatpush1.msra.mxu0 0.0
    %205 = vmatprep.subr.mxu0 0.0
    %206 = vmatpush1.msra.mxu0 0.0
    %207 = vmatprep.subr.mxu0 0.0
    %208 = vmatpush1.msra.mxu0 0.0
    %209 = vmatprep.subr.mxu0 0.0
    %210 = vmatpush1.msra.mxu0 0.0
    %211 = vmatprep.subr.mxu0 0.0
    %212 = vmatpush1.msra.mxu0 0.0
    %213 = vmatprep.subr.mxu0 0.0
    %214 = vmatpush1.msra.mxu0 0.0
    %215 = vmatprep.subr.mxu0 0.0
    %216 = vmatpush1.msra.mxu0 0.0
    %217 = vmatprep.subr.mxu0 0.0
    %218 = vmatpush1.msra.mxu0 0.0
    %219 = vmatprep.subr.mxu0 0.0
    %220 = vmatpush1.msra.mxu0 0.0
    %221 = vmatprep.subr.mxu0 0.0
    %222 = vmatpush1.msra.mxu0 0.0
    %223 = vmatprep.subr.mxu0 0.0
    %224 = vmatpush1.msra.mxu0 0.0
    %225 = vmatprep.subr.mxu0 0.0
    %226 = vmatpush1.msra.mxu0 0.0
    %227 = vmatprep.subr.mxu0 0.0
    %228 = vmatpush1.msra.mxu0 0.0
    %229 = vmatprep.subr.mxu0 0.0
    %230 = vmatpush1.msra.mxu0 0.0
    %231 = vmatprep.subr.mxu0 0.0
    %232 = vmatpush1.msra.mxu0 0.0
    %233 = vmatprep.subr.mxu0 0.0
    %234 = vmatpush1.msra.mxu0 0.0
    %235 = vmatprep.subr.mxu0 0.0
    %236 = vmatpush1.msra.mxu0 0.0
    %237 = vmatprep.subr.mxu0 0.0
    %238 = vmatpush1.msra.mxu0 0.0
    %239 = vmatprep.subr.mxu0 0.0
    %240 = vmatpush1.msra.mxu0 0.0
    %241 = vmatprep.subr.mxu0 0.0
    %242 = vmatpush1.msra.mxu0 0.0
    %243 = vmatprep.subr.mxu0 0.0
    %244 = vmatpush1.msra.mxu0 0.0
    %245 = vmatprep.subr.mxu0 0.0
    %246 = vmatpush1.msra.mxu0 0.0
    %247 = vmatprep.subr.mxu0 0.0
    %248 = vmatpush1.msra.mxu0 0.0
    %249 = vmatprep.mubr.f32.mxu0 0.0
    %250 = vmatmul.mubr.f32.gmra.mrb[0].mxu0 %v183
    %v251 = vpop.f32.mrb[0].mxu0
    %v252 = vadd.f32 0.0, %v251
    %v253 = vpop.f32.mrb[0].mxu0
    %254 = vdwg.mxu0
    %255 = vmatprep.subr.mxu0 0.0
    %256 = vmatpush1.msra.mxu0 %v178
    %257 = vmatprep.subr.mxu0 0.0
    %258 = vmatpush1.msra.mxu0 0.0
    %259 = vmatprep.subr.mxu0 0.0
    %260 = vmatpush1.msra.mxu0 0.0
    %261 = vmatprep.subr.mxu0 0.0
    %262 = vmatpush1.msra.mxu0 0.0
    %263 = vmatprep.subr.mxu0 0.0
    %264 = vmatpush1.msra.mxu0 0.0
    %265 = vmatprep.subr.mxu0 0.0
    %266 = vmatpush1.msra.mxu0 0.0
    %267 = vmatprep.subr.mxu0 0.0
    %268 = vmatpush1.msra.mxu0 0.0
    %269 = vmatprep.subr.mxu0 0.0
    %270 = vmatpush1.msra.mxu0 0.0
    %271 = vmatprep.subr.mxu0 0.0
    %272 = vmatpush1.msra.mxu0 0.0
    %273 = vmatprep.subr.mxu0 0.0
    %274 = vmatpush1.msra.mxu0 0.0
    %275 = vmatprep.subr.mxu0 0.0
    %276 = vmatpush1.msra.mxu0 0.0
    %277 = vmatprep.subr.mxu0 0.0
    %278 = vmatpush1.msra.mxu0 0.0
    %279 = vmatprep.subr.mxu0 0.0
    %280 = vmatpush1.msra.mxu0 0.0
    %281 = vmatprep.subr.mxu0 0.0
    %282 = vmatpush1.msra.mxu0 0.0
    %283 = vmatprep.subr.mxu0 0.0
    %284 = vmatpush1.msra.mxu0 0.0
    %285 = vmatprep.subr.mxu0 0.0
    %286 = vmatpush1.msra.mxu0 0.0
    %287 = vmatprep.subr.mxu0 0.0
    %288 = vmatpush1.msra.mxu0 0.0
    %289 = vmatprep.subr.mxu0 0.0
    %290 = vmatpush1.msra.mxu0 0.0
    %291 = vmatprep.subr.mxu0 0.0
    %292 = vmatpush1.msra.mxu0 0.0
    %293 = vmatprep.subr.mxu0 0.0
    %294 = vmatpush1.msra.mxu0 0.0
    %295 = vmatprep.subr.mxu0 0.0
    %296 = vmatpush1.msra.mxu0 0.0
    %297 = vmatprep.subr.mxu0 0.0
    %298 = vmatpush1.msra.mxu0 0.0
    %299 = vmatprep.subr.mxu0 0.0
    %300 = vmatpush1.msra.mxu0 0.0
    %301 = vmatprep.subr.mxu0 0.0
    %302 = vmatpush1.msra.mxu0 0.0
    %303 = vmatprep.subr.mxu0 0.0
    %304 = vmatpush1.msra.mxu0 0.0
    %305 = vmatprep.subr.mxu0 0.0
    %306 = vmatpush1.msra.mxu0 0.0
    %307 = vmatprep.subr.mxu0 0.0
    %308 = vmatpush1.msra.mxu0 0.0
    %309 = vmatprep.subr.mxu0 0.0
    %310 = vmatpush1.msra.mxu0 0.0
    %311 = vmatprep.subr.mxu0 0.0
    %312 = vmatpush1.msra.mxu0 0.0
    %313 = vmatprep.subr.mxu0 0.0
    %314 = vmatpush1.msra.mxu0 0.0
    %315 = vmatprep.subr.mxu0 0.0
    %316 = vmatpush1.msra.mxu0 0.0
    %317 = vmatprep.subr.mxu0 0.0
    %318 = vmatpush1.msra.mxu0 0.0
    %319 = vmatprep.mubr.f32.mxu0 0.0
    %320 = vmatmul.mubr.f32.gmra.mrb[0].mxu0 %v183
    %v321 = vpop.f32.mrb[0].mxu0
    %v322 = vadd.f32 0.0, %v321
    %v323 = vpop.f32.mrb[0].mxu0
    %324 = vdwg.mxu0
    %v325 = vmin.f32 %v252, %v322
    %vm326 = vcmask 58368
    %v327 = vsel %vm326, %v325, 0.0
    %328 = vadd.xlane.f32.xlu0 %v327
    %v329 = vpop.xlane.xlu0 %328
    %v330 = vrot.slane %v329, 4
    %v331 = vadd.f32 %v329, %v330
    %v332 = vrot.slane %v331, 2
    %v333 = vadd.f32 %v331, %v332
    %v334 = vrot.slane %v333, 1
    %v335 = vadd.f32 %v333, %v334
    %s336 = vtos %v335
    %s337 = scalar_lea.smem [#allocation2], 0
    %338 = sst [smem:[%s337]] %s336
    // Predicated region
    $region18: #{tpu_custom_call.1} parent=1 // pred_check
      _
    $region19: #{tpu_custom_call.1} parent=1 // pred_check_branch
      %340 = sbr.rel (0) target = $region21
    $region20: #{tpu_custom_call.1} parent=1 // pred_region
      %s342 = ssub.s32 16, 16
      %343 = vsyncadd [#allocation3], %s342
      %346 = dma.smem_to_hbm [#allocation2], 16, %s4, [#allocation3]
    $region21: #{tpu_custom_call.1} parent=1 // pred_fallthru
      _
    // Predicated region
    $region22: #{tpu_custom_call.1} parent=1 // pred_check
      _
    $region23: #{tpu_custom_call.1} parent=1 // pred_check_branch
      %348 = sbr.rel (0) target = $region25
    $region24: #{tpu_custom_call.1} parent=1 // pred_region
      %349 = dma.done [#allocation3], 16
    $region25: #{tpu_custom_call.1} parent=1 // pred_fallthru
      _
    %350 = sfence
    %351 = vsyncpa [#allocation3], 1

</llo_original>
